<compile_context>
chip_gen: v5e
topology: v5e:2x2
jax: 0.10.0
libtpu: 0.0.40
codegen_flags: <defaults>
</compile_context>

<pallas_src>
import functools

import jax
import jax.numpy as jnp
from jax.experimental import pallas as pl
from jax.experimental.pallas import tpu as pltpu


def _coupling_kernel(mask_ref, z_ref, w1_ref, b1_ref, w2_ref, b2_ref,
                     w3_ref, b3_ref, x_ref, logj_ref):
    """All refs are lane-dense: batch on the last (128-lane) axis."""
    cdt = w1_ref.dtype                   # MXU operand dtype (f32 or bf16)
    D = x_ref.shape[0]

    zt = z_ref[...]                      # (D, TN) f32
    frozen = mask_ref[...] > 0.5         # (D, 1) bool, binary coupling mask
    x_frozen = jnp.where(frozen, zt, 0.0)          # == mask * z for binary mask

    # Coupling net (3-layer MLP) on the frozen part; contractions on the MXU
    # with f32 accumulation; elementwise epilogue stays in f32.
    h1 = jnp.tanh(
        jnp.dot(w1_ref[...], x_frozen.astype(cdt),
                preferred_element_type=jnp.float32) + b1_ref[...])      # (H, TN)
    h2 = jnp.tanh(
        jnp.dot(w2_ref[...], h1.astype(cdt),
                preferred_element_type=jnp.float32) + b2_ref[...])      # (H, TN)
    p = (jnp.dot(w3_ref[...], h2.astype(cdt),
                 preferred_element_type=jnp.float32) + b3_ref[...])     # (2D, TN)
    # Sublane slice at row D (multiple of 8 for D=16) — free, no extra matmul.
    p2 = p[:D, :]                         # log-scale
    p1 = p[D:, :]                         # shift

    # Affine coupling update + log-Jacobian; both stores are lane-dense.
    # TODO(synk): v5e EUP relief — checkerboard compaction (exp only on the
    # D/2 active rows, third-layer M 32->16) is valid for strictly binary
    # masks; left to the model owner.
    x_ref[...] = jnp.where(frozen, zt, p1 + zt * jnp.exp(p2))           # (D, TN)
    logj_ref[...] = jnp.sum(jnp.where(frozen, 0.0, p2),
                            axis=0, keepdims=True)                      # (1, TN)


def _round_up(x, m):
    return (x + m - 1) // m * m


def _auto_matmul_dtype():
    """bf16 MXU operands on v6e/v7x (f32 lowers to bf16x3 passes); f32 elsewhere."""
    try:
        kind = jax.devices()[0].device_kind.lower()
    except Exception:
        return jnp.float32
    if "v6" in kind or "v7" in kind:
        return jnp.bfloat16
    return jnp.float32


@functools.partial(jax.jit, static_argnames=("block_b", "matmul_dtype"))
def affine_coupling_flow_forward_lane_dense(zt, mask, params, *, block_b=4096,
                                            matmul_dtype=None):
    """Lane-dense forward: zt is (D, B); returns (x^T (D, B), logJ (B,)).

    Use this entry point when chaining coupling layers so the (B,D)<->(D,B)
    transpose is paid once for the whole flow stack, not per layer.
    """
    if matmul_dtype is None:
        matmul_dtype = _auto_matmul_dtype()

    D, B = zt.shape
    w1, b1, w2, b2, w3, b3 = params
    H = w1.shape[1]

    # ---- tiny-weight layout plumbing (negligible bytes) ----
    mask_col = mask.reshape(D, 1).astype(jnp.float32)
    w1t = w1.T.astype(matmul_dtype)                     # (H, D)
    w2t = w2.T.astype(matmul_dtype)                     # (H, H)
    w3t = w3.T.astype(matmul_dtype)                     # (2D, H) single matmul
    b1c = b1.reshape(H, 1).astype(jnp.float32)
    b2c = b2.reshape(H, 1).astype(jnp.float32)
    b3c = b3.reshape(2 * D, 1).astype(jnp.float32)

    # ---- batch tiling: big lane-dense tiles, but keep >= ~4 grid steps so
    # v7x's two TensorCores both get work on the "parallel" axis ----
    block_b = _round_up(block_b, 128)
    b128 = _round_up(B, 128)
    tn = min(block_b, max(128, _round_up(pl.cdiv(b128, 4), 128)))
    b_pad = _round_up(b128, tn)

    zt_f32 = zt.astype(jnp.float32)
    if b_pad != B:
        zt_f32 = jnp.pad(zt_f32, ((0, 0), (0, b_pad - B)))   # no-op when aligned

    # Only override the scoped-VMEM default when a very large block_b would
    # exceed it; stay below v7x's 64 MiB physical VMEM.
    bytes_per_lane = 4 * (2 * 2 * D      # z & x tiles, double-buffered
                          + 2 * 2        # logJ tiles, double-buffered
                          + 2 * H        # h1, h2 temporaries
                          + 2 * D)       # pre-slice third-layer output
    est_vmem = tn * bytes_per_lane + (2 << 20)
    vmem_limit = None
    if est_vmem > 28 * (1 << 20):
        vmem_limit = min(est_vmem + (4 << 20), 60 * (1 << 20))

    const = lambda i: (0, 0)
    grid = (b_pad // tn,)

    # TODO(synk): on v7x, if profiling shows only one TensorCore busy with
    # "parallel", switch this axis to pltpu.CORE_PARALLEL (or pl.core_map).
    x_t, logj_row = pl.pallas_call(
        _coupling_kernel,
        out_shape=(
            jax.ShapeDtypeStruct((D, b_pad), jnp.float32),
            jax.ShapeDtypeStruct((1, b_pad), jnp.float32),
        ),
        grid_spec=pltpu.PrefetchScalarGridSpec(
            num_scalar_prefetch=0,
            grid=grid,
            in_specs=[
                pl.BlockSpec((D, 1), const),               # mask column
                pl.BlockSpec((D, tn), lambda i: (0, i)),   # z^T batch tile
                pl.BlockSpec((H, D), const),               # w1^T   (VMEM-resident)
                pl.BlockSpec((H, 1), const),               # b1
                pl.BlockSpec((H, H), const),               # w2^T   (VMEM-resident)
                pl.BlockSpec((H, 1), const),               # b2
                pl.BlockSpec((2 * D, H), const),           # w3^T   (merged)
                pl.BlockSpec((2 * D, 1), const),           # b3
            ],
            out_specs=(
                pl.BlockSpec((D, tn), lambda i: (0, i)),   # x^T batch tile
                pl.BlockSpec((1, tn), lambda i: (0, i)),   # logJ (lane-dense)
            ),
        ),
        compiler_params=pltpu.CompilerParams(
            dimension_semantics=("parallel",),
            vmem_limit_bytes=vmem_limit,
        ),
    )(mask_col, zt_f32, w1t, b1c, w2t, b2c, w3t, b3c)

    return x_t[:, :B], logj_row[0, :B]


@functools.partial(jax.jit, static_argnames=("block_b", "matmul_dtype"))
def affine_coupling_flow_forward(z, mask, params, *, block_b=4096,
                                 matmul_dtype=None):
    """Module-equivalent API: z is (B, D); returns (x (B, D), logJ (B,)).

    Note: the transposes here are the dominant HBM cost for a single layer;
    prefer `affine_coupling_flow_forward_lane_dense` across a flow stack.
    """
    xt, logJ = affine_coupling_flow_forward_lane_dense(
        z.T, mask, params, block_b=block_b, matmul_dtype=matmul_dtype)
    return xt.T, logJ


def reference_forward(z, mask, params):
    """Plain-JAX reference mirroring the PyTorch module semantics."""
    w1, b1, w2, b2, w3, b3 = params
    B, D = z.shape
    m = mask.reshape(1, D)
    x_frozen = m * z
    x_active = (1.0 - m) * z
    # net(x_frozen.unsqueeze(-1)) -> (B, 2, D)
    h = jnp.tanh(x_frozen @ w1 + b1)
    h = jnp.tanh(h @ w2 + b2)
    net_out = (h @ w3 + b3).reshape(B, 2, D)
    p2, p1 = net_out[:, 0], net_out[:, 1]
    x = (1.0 - m) * p1 + x_active * jnp.exp(p2) + x_frozen
    logJ = jnp.sum((1.0 - m) * p2, axis=tuple(range(1, p2.ndim)))
    return x, logJ


def make_params(key, D, H):
    ks = jax.random.split(key, 3)
    w1 = 0.1 * jax.random.normal(ks[0], (D, H), jnp.float32)
    b1 = jnp.zeros((H,), jnp.float32)
    w2 = 0.1 * jax.random.normal(ks[1], (H, H), jnp.float32)
    b2 = jnp.zeros((H,), jnp.float32)
    w3 = 0.1 * jax.random.normal(ks[2], (H, 2 * D), jnp.float32)
    b3 = jnp.zeros((2 * D,), jnp.float32)
    return (w1, b1, w2, b2, w3, b3)


if __name__ == "__main__":
    key = jax.random.PRNGKey(0)
    kz, kp, kz2 = jax.random.split(key, 3)

    D, H = 16, 32
    mask = (jnp.arange(D) % 2).astype(jnp.float32)   # binary checkerboard mask
    params = make_params(kp, D, H)

    # 1) Small batch, strict f32 check against the reference.
    B = 8
    z = jax.random.normal(kz, (B, D), jnp.float32)
    x, logJ = jax.block_until_ready(
        affine_coupling_flow_forward(z, mask, params, matmul_dtype=jnp.float32))
    x_ref, logJ_ref = reference_forward(z, mask, params)
    assert x.shape == (B, D) and logJ.shape == (B,)
    assert jnp.allclose(x, x_ref, atol=1e-5, rtol=1e-5)
    assert jnp.allclose(logJ, logJ_ref, atol=1e-5, rtol=1e-5)

    # 2) Larger non-multiple batch: exercises multi-step grid + lane padding.
    B2 = 1000
    z2 = jax.random.normal(kz2, (B2, D), jnp.float32)
    x2, logJ2 = jax.block_until_ready(
        affine_coupling_flow_forward(z2, mask, params, block_b=256,
                                     matmul_dtype=jnp.float32))
    x2_ref, logJ2_ref = reference_forward(z2, mask, params)
    assert jnp.allclose(x2, x2_ref, atol=1e-5, rtol=1e-5)
    assert jnp.allclose(logJ2, logJ2_ref, atol=1e-5, rtol=1e-5)

    # 3) bf16 MXU-operand path (v6e/v7x auto default) — loosened tolerance.
    xb, logJb = jax.block_until_ready(
        affine_coupling_flow_forward(z2, mask, params,
                                     matmul_dtype=jnp.bfloat16))
    assert jnp.allclose(xb, x2_ref, atol=5e-2, rtol=5e-2)
    assert jnp.allclose(logJb, logJ2_ref, atol=5e-2, rtol=5e-2)

    # 4) Lane-dense chaining: two coupling layers (alternating masks) composed
    #    entirely in the (D, B) layout; transpose paid once at entry/exit.
    mask_b = 1.0 - mask
    params_b = make_params(jax.random.fold_in(kp, 1), D, H)
    zt = z2.T
    xt1, lj1 = affine_coupling_flow_forward_lane_dense(
        zt, mask, params, matmul_dtype=jnp.float32)
    xt2, lj2 = affine_coupling_flow_forward_lane_dense(
        xt1, mask_b, params_b, matmul_dtype=jnp.float32)
    x_chain = jax.block_until_ready(xt2.T)
    x1_ref, lj1_ref = reference_forward(z2, mask, params)
    xc_ref, ljb_ref = reference_forward(x1_ref, mask_b, params_b)
    assert jnp.allclose(x_chain, xc_ref, atol=1e-4, rtol=1e-4)
    assert jnp.allclose(lj1 + lj2, lj1_ref + ljb_ref, atol=1e-4, rtol=1e-4)

    # TODO(synk): wandb logging branch (log_params['log']) is host-side
    # telemetry and reverse() was not requested; neither is ported.
    print("KERNEL_OK")
</pallas_src>

<mosaic_0001>
module attributes {stable_mosaic.version = 11 : i64} {
  func.func @_coupling_kernel(%arg0: i32, %arg1: memref<16x1xf32, #tpu.memory_space<vmem>>, %arg2: memref<16x128xf32, #tpu.memory_space<vmem>>, %arg3: memref<32x16xf32, #tpu.memory_space<vmem>>, %arg4: memref<32x1xf32, #tpu.memory_space<vmem>>, %arg5: memref<32x32xf32, #tpu.memory_space<vmem>>, %arg6: memref<32x1xf32, #tpu.memory_space<vmem>>, %arg7: memref<32x32xf32, #tpu.memory_space<vmem>>, %arg8: memref<32x1xf32, #tpu.memory_space<vmem>>, %arg9: memref<16x128xf32, #tpu.memory_space<vmem>>, %arg10: memref<1x128xf32, #tpu.memory_space<vmem>>) attributes {dimension_semantics = [#tpu.dimension_semantics<parallel>], iteration_bounds = array<i64: 1>, scalar_prefetch = 0 : i64, scratch_operands = 0 : i64, tpu.core_type = #tpu.core_type<tc>, window_params = [{pipeline_mode = #tpu.pipeline_mode<synchronous>, transform_indices = @transform_0, window_bounds = array<i64: 16, 1>}, {transform_indices = @transform_1, window_bounds = array<i64: 16, 128>}, {pipeline_mode = #tpu.pipeline_mode<synchronous>, transform_indices = @transform_2, window_bounds = array<i64: 32, 16>}, {pipeline_mode = #tpu.pipeline_mode<synchronous>, transform_indices = @transform_3, window_bounds = array<i64: 32, 1>}, {pipeline_mode = #tpu.pipeline_mode<synchronous>, transform_indices = @transform_4, window_bounds = array<i64: 32, 32>}, {pipeline_mode = #tpu.pipeline_mode<synchronous>, transform_indices = @transform_5, window_bounds = array<i64: 32, 1>}, {pipeline_mode = #tpu.pipeline_mode<synchronous>, transform_indices = @transform_6, window_bounds = array<i64: 32, 32>}, {pipeline_mode = #tpu.pipeline_mode<synchronous>, transform_indices = @transform_7, window_bounds = array<i64: 32, 1>}, {transform_indices = @transform_8, window_bounds = array<i64: 16, 128>}, {transform_indices = @transform_9, window_bounds = array<i64: 1, 128>}]} {
    %c0 = arith.constant 0 : index
    %c0_0 = arith.constant 0 : index
    %0 = vector.load %arg2[%c0, %c0_0] : memref<16x128xf32, #tpu.memory_space<vmem>>, vector<16x128xf32>
    %c0_1 = arith.constant 0 : index
    %c0_2 = arith.constant 0 : index
    %1 = vector.load %arg1[%c0_1, %c0_2] : memref<16x1xf32, #tpu.memory_space<vmem>>, vector<16x1xf32>
    %cst = arith.constant 5.000000e-01 : f32
    %2 = vector.broadcast %cst : f32 to vector<16x1xf32>
    %3 = arith.cmpf ogt, %1, %2 : vector<16x1xf32>
    %cst_3 = arith.constant 0.000000e+00 : f32
    %4 = vector.shape_cast %3 : vector<16x1xi1> to vector<16x1xi1>
    %5 = vector.broadcast %4 : vector<16x1xi1> to vector<16x128xi1>
    %6 = vector.broadcast %cst_3 : f32 to vector<16x128xf32>
    %7 = arith.select %5, %0, %6 : vector<16x128xi1>, vector<16x128xf32>
    %c0_4 = arith.constant 0 : index
    %c0_5 = arith.constant 0 : index
    %8 = vector.load %arg3[%c0_4, %c0_5] : memref<32x16xf32, #tpu.memory_space<vmem>>, vector<32x16xf32>
    %cst_6 = arith.constant dense<0.000000e+00> : vector<32x128xf32>
    %9 = tpu.matmul %8, %7, %cst_6 {dimension_numbers = #tpu.dot_dimension_numbers<[1], [0], [0], [1], [0, 0, 1, 1], [], []>} : vector<32x16xf32>, vector<16x128xf32>, vector<32x128xf32> -> vector<32x128xf32>
    %c0_7 = arith.constant 0 : index
    %c0_8 = arith.constant 0 : index
    %10 = vector.load %arg4[%c0_7, %c0_8] : memref<32x1xf32, #tpu.memory_space<vmem>>, vector<32x1xf32>
    %11 = vector.broadcast %10 : vector<32x1xf32> to vector<32x128xf32>
    %12 = arith.addf %9, %11 : vector<32x128xf32>
    %13 = math.tanh %12 : vector<32x128xf32>
    %c0_9 = arith.constant 0 : index
    %c0_10 = arith.constant 0 : index
    %14 = vector.load %arg5[%c0_9, %c0_10] : memref<32x32xf32, #tpu.memory_space<vmem>>, vector<32x32xf32>
    %cst_11 = arith.constant dense<0.000000e+00> : vector<32x128xf32>
    %15 = tpu.matmul %14, %13, %cst_11 {dimension_numbers = #tpu.dot_dimension_numbers<[1], [0], [0], [1], [0, 0, 1, 1], [], []>} : vector<32x32xf32>, vector<32x128xf32>, vector<32x128xf32> -> vector<32x128xf32>
    %c0_12 = arith.constant 0 : index
    %c0_13 = arith.constant 0 : index
    %16 = vector.load %arg6[%c0_12, %c0_13] : memref<32x1xf32, #tpu.memory_space<vmem>>, vector<32x1xf32>
    %17 = vector.broadcast %16 : vector<32x1xf32> to vector<32x128xf32>
    %18 = arith.addf %15, %17 : vector<32x128xf32>
    %19 = math.tanh %18 : vector<32x128xf32>
    %c0_14 = arith.constant 0 : index
    %c0_15 = arith.constant 0 : index
    %20 = vector.load %arg7[%c0_14, %c0_15] : memref<32x32xf32, #tpu.memory_space<vmem>>, vector<32x32xf32>
    %cst_16 = arith.constant dense<0.000000e+00> : vector<32x128xf32>
    %21 = tpu.matmul %20, %19, %cst_16 {dimension_numbers = #tpu.dot_dimension_numbers<[1], [0], [0], [1], [0, 0, 1, 1], [], []>} : vector<32x32xf32>, vector<32x128xf32>, vector<32x128xf32> -> vector<32x128xf32>
    %c0_17 = arith.constant 0 : index
    %c0_18 = arith.constant 0 : index
    %22 = vector.load %arg8[%c0_17, %c0_18] : memref<32x1xf32, #tpu.memory_space<vmem>>, vector<32x1xf32>
    %23 = vector.broadcast %22 : vector<32x1xf32> to vector<32x128xf32>
    %24 = arith.addf %21, %23 : vector<32x128xf32>
    %25 = vector.extract_strided_slice %24 {offsets = [0, 0], sizes = [16, 128], strides = [1, 1]} : vector<32x128xf32> to vector<16x128xf32>
    %26 = vector.extract_strided_slice %24 {offsets = [16, 0], sizes = [16, 128], strides = [1, 1]} : vector<32x128xf32> to vector<16x128xf32>
    %27 = math.exp %25 : vector<16x128xf32>
    %28 = arith.mulf %0, %27 : vector<16x128xf32>
    %29 = arith.addf %26, %28 : vector<16x128xf32>
    %30 = vector.shape_cast %3 : vector<16x1xi1> to vector<16x1xi1>
    %31 = vector.broadcast %30 : vector<16x1xi1> to vector<16x128xi1>
    %32 = arith.select %31, %0, %29 : vector<16x128xi1>, vector<16x128xf32>
    %c0_19 = arith.constant 0 : index
    %c0_20 = arith.constant 0 : index
    %33 = vector.load %arg9[%c0_19, %c0_20] : memref<16x128xf32, #tpu.memory_space<vmem>>, vector<16x128xf32>
    tpu.vector_store %arg9[%c0_19, %c0_20], %32 {strides = array<i32>} : memref<16x128xf32, #tpu.memory_space<vmem>>, vector<16x128xf32>,
    %cst_21 = arith.constant 0.000000e+00 : f32
    %34 = vector.shape_cast %3 : vector<16x1xi1> to vector<16x1xi1>
    %35 = vector.broadcast %34 : vector<16x1xi1> to vector<16x128xi1>
    %36 = vector.broadcast %cst_21 : f32 to vector<16x128xf32>
    %37 = arith.select %35, %36, %25 : vector<16x128xi1>, vector<16x128xf32>
    %cst_22 = arith.constant dense<0.000000e+00> : vector<128xf32>
    %38 = vector.multi_reduction <add>, %37, %cst_22 [0] : vector<16x128xf32> to vector<128xf32>
    %39 = vector.shape_cast %38 : vector<128xf32> to vector<1x128xf32>
    %c0_23 = arith.constant 0 : index
    %c0_24 = arith.constant 0 : index
    %40 = vector.load %arg10[%c0_23, %c0_24] : memref<1x128xf32, #tpu.memory_space<vmem>>, vector<1x128xf32>
    tpu.vector_store %arg10[%c0_23, %c0_24], %39 {strides = array<i32>} : memref<1x128xf32, #tpu.memory_space<vmem>>, vector<1x128xf32>,
    return
  }
  func.func @transform_0(%arg0: i32) -> (i32, i32) {
    %c0_i32 = arith.constant 0 : i32
    %c0_i32_0 = arith.constant 0 : i32
    %c0_i32_1 = arith.constant 0 : i32
    return %c0_i32, %c0_i32_0 : i32, i32
  }
  func.func @transform_1(%arg0: i32) -> (i32, i32) {
    %c0_i32 = arith.constant 0 : i32
    %c0_i32_0 = arith.constant 0 : i32
    return %c0_i32, %arg0 : i32, i32
  }
  func.func @transform_2(%arg0: i32) -> (i32, i32) {
    %c0_i32 = arith.constant 0 : i32
    %c0_i32_0 = arith.constant 0 : i32
    %c0_i32_1 = arith.constant 0 : i32
    return %c0_i32, %c0_i32_0 : i32, i32
  }
  func.func @transform_3(%arg0: i32) -> (i32, i32) {
    %c0_i32 = arith.constant 0 : i32
    %c0_i32_0 = arith.constant 0 : i32
    %c0_i32_1 = arith.constant 0 : i32
    return %c0_i32, %c0_i32_0 : i32, i32
  }
  func.func @transform_4(%arg0: i32) -> (i32, i32) {
    %c0_i32 = arith.constant 0 : i32
    %c0_i32_0 = arith.constant 0 : i32
    %c0_i32_1 = arith.constant 0 : i32
    return %c0_i32, %c0_i32_0 : i32, i32
  }
  func.func @transform_5(%arg0: i32) -> (i32, i32) {
    %c0_i32 = arith.constant 0 : i32
    %c0_i32_0 = arith.constant 0 : i32
    %c0_i32_1 = arith.constant 0 : i32
    return %c0_i32, %c0_i32_0 : i32, i32
  }
  func.func @transform_6(%arg0: i32) -> (i32, i32) {
    %c0_i32 = arith.constant 0 : i32
    %c0_i32_0 = arith.constant 0 : i32
    %c0_i32_1 = arith.constant 0 : i32
    return %c0_i32, %c0_i32_0 : i32, i32
  }
  func.func @transform_7(%arg0: i32) -> (i32, i32) {
    %c0_i32 = arith.constant 0 : i32
    %c0_i32_0 = arith.constant 0 : i32
    %c0_i32_1 = arith.constant 0 : i32
    return %c0_i32, %c0_i32_0 : i32, i32
  }
  func.func @transform_8(%arg0: i32) -> (i32, i32) {
    %c0_i32 = arith.constant 0 : i32
    %c0_i32_0 = arith.constant 0 : i32
    return %c0_i32, %arg0 : i32, i32
  }
  func.func @transform_9(%arg0: i32) -> (i32, i32) {
    %c0_i32 = arith.constant 0 : i32
    %c0_i32_0 = arith.constant 0 : i32
    return %c0_i32, %arg0 : i32, i32
  }
}

</mosaic_0001>

<llo_original>
// kernel: affine_coupling_flow_forward_lane_dense.1
$region0: #{affine_coupling_flow_forward_lane_dense.1}
  #allocation0 [shape = 'u32[]', space=smem, size = 0x4, offset = 0x4, fixed_abs, tag = 'smem constant byte address 0x4 - core index']
  #allocation1 [shape = 'u32[72,128]{1,0:T(1,128)}', space=vmem, size = 0x9000, scoped, tag = 'internal scratch']
  %s0 = inlined_call_operand.vmem [shape: f32[16,1], index: 0, kind: input, shape index: {}]
  %s1 = inlined_call_operand.vmem [shape: f32[16,128], index: 1, kind: input, shape index: {}]
  %s2 = inlined_call_operand.vmem [shape: f32[32,16], index: 2, kind: input, shape index: {}]
  %s3 = inlined_call_operand.vmem [shape: f32[32,1], index: 3, kind: input, shape index: {}]
  %s4 = inlined_call_operand.vmem [shape: f32[32,32], index: 4, kind: input, shape index: {}]
  %s5 = inlined_call_operand.vmem [shape: f32[32,1], index: 5, kind: input, shape index: {}]
  %s6 = inlined_call_operand.vmem [shape: f32[32,32], index: 6, kind: input, shape index: {}]
  %s7 = inlined_call_operand.vmem [shape: f32[32,1], index: 7, kind: input, shape index: {}]
  %s8 = inlined_call_operand.vmem [shape: f32[16,128], index: 8, kind: output, shape index: {0}]
  %s9 = inlined_call_operand.vmem [shape: f32[1,128], index: 9, kind: output, shape index: {1}]
  %10 = xla_tuple %s8, %s9
  %s11 = sld [smem:[#allocation0]]
  $region50: #{affine_coupling_flow_forward_lane_dense.1} parent=0
    _
  %s13 = ssub.s32 1, %s11
  %s14 = scalar_select 0, %s13, %s11
  // Predicated region
  $region2: #{affine_coupling_flow_forward_lane_dense.1} parent=0 // pred_check
    _
  $region3: #{affine_coupling_flow_forward_lane_dense.1} parent=0 // pred_check_branch
    %16 = sbr.rel (0) target = $region5
  $region4: #{affine_coupling_flow_forward_lane_dense.1} parent=0 // pred_region
    _
  $region5: #{affine_coupling_flow_forward_lane_dense.1} parent=0 // pred_fallthru
    _
  // Predicated region
  $region6: #{affine_coupling_flow_forward_lane_dense.1} parent=0 // pred_check
    _
  $region7: #{affine_coupling_flow_forward_lane_dense.1} parent=0 // pred_check_branch
    %18 = sbr.rel (0) target = $region9
  $region8: #{affine_coupling_flow_forward_lane_dense.1} parent=0 // pred_region
    _
  $region9: #{affine_coupling_flow_forward_lane_dense.1} parent=0 // pred_fallthru
    _
  // Predicated region
  $region10: #{affine_coupling_flow_forward_lane_dense.1} parent=0 // pred_check
    _
  $region11: #{affine_coupling_flow_forward_lane_dense.1} parent=0 // pred_check_branch
    %20 = sbr.rel (0) target = $region13
  $region12: #{affine_coupling_flow_forward_lane_dense.1} parent=0 // pred_region
    _
  $region13: #{affine_coupling_flow_forward_lane_dense.1} parent=0 // pred_fallthru
    _
  // Predicated region
  $region14: #{affine_coupling_flow_forward_lane_dense.1} parent=0 // pred_check
    _
  $region15: #{affine_coupling_flow_forward_lane_dense.1} parent=0 // pred_check_branch
    %22 = sbr.rel (0) target = $region17
  $region16: #{affine_coupling_flow_forward_lane_dense.1} parent=0 // pred_region
    _
  $region17: #{affine_coupling_flow_forward_lane_dense.1} parent=0 // pred_fallthru
    _
  // Predicated region
  $region18: #{affine_coupling_flow_forward_lane_dense.1} parent=0 // pred_check
    _
  $region19: #{affine_coupling_flow_forward_lane_dense.1} parent=0 // pred_check_branch
    %24 = sbr.rel (0) target = $region21
  $region20: #{affine_coupling_flow_forward_lane_dense.1} parent=0 // pred_region
    _
  $region21: #{affine_coupling_flow_forward_lane_dense.1} parent=0 // pred_fallthru
    _
  // Predicated region
  $region22: #{affine_coupling_flow_forward_lane_dense.1} parent=0 // pred_check
    _
  $region23: #{affine_coupling_flow_forward_lane_dense.1} parent=0 // pred_check_branch
    %26 = sbr.rel (0) target = $region25
  $region24: #{affine_coupling_flow_forward_lane_dense.1} parent=0 // pred_region
    _
  $region25: #{affine_coupling_flow_forward_lane_dense.1} parent=0 // pred_fallthru
    _
  // Predicated region
  $region26: #{affine_coupling_flow_forward_lane_dense.1} parent=0 // pred_check
    _
  $region27: #{affine_coupling_flow_forward_lane_dense.1} parent=0 // pred_check_branch
    %28 = sbr.rel (0) target = $region29
  $region28: #{affine_coupling_flow_forward_lane_dense.1} parent=0 // pred_region
    _
  $region29: #{affine_coupling_flow_forward_lane_dense.1} parent=0 // pred_fallthru
    _
  // Predicated region
  $region30: #{affine_coupling_flow_forward_lane_dense.1} parent=0 // pred_check
    _
  $region31: #{affine_coupling_flow_forward_lane_dense.1} parent=0 // pred_check_branch
    %30 = sbr.rel (0) target = $region33
  $region32: #{affine_coupling_flow_forward_lane_dense.1} parent=0 // pred_region
    _
  $region33: #{affine_coupling_flow_forward_lane_dense.1} parent=0 // pred_fallthru
    _
  %v31 = vld [vmem:[%s1] sm:$0xff]
  %v32 = vld [vmem:[%s1 + $0x8] sm:$0xff]
  %v33 = vld [vmem:[%s0] sm:$0xff]
  %v34 = vld [vmem:[%s0 + $0x8] sm:$0xff]
  %vm35 = vcmp.gt.f32.partialorder %v33, 0.5
  %vm36 = vcmp.gt.f32.partialorder %v34, 0.5
  %v37 = vsel %vm35, 1, 0
  %v38 = vsel %vm36, 1, 0
  %39 = vset.pattern.permute.xlu0 0
  %40 = vperm.xlu0 %39, %v37
  %v41 = vpop.permute.xlu0 %40
  %42 = vset.pattern.permute.xlu0 0
  %43 = vperm.xlu0 %42, %v38
  %v44 = vpop.permute.xlu0 %43
  %vm45 = vcmp.eq.s32.totalorder %v41, 1
  %vm46 = vcmp.eq.s32.totalorder %v44, 1
  %v47 = vsel %vm45, %v31, 0.0
  %v48 = vsel %vm46, %v32, 0.0
  %v49 = vld [vmem:[%s2] sm:$0xff]
  %v50 = vld [vmem:[%s2 + $0x8] sm:$0xff]
  %v51 = vld [vmem:[%s2 + $0x10] sm:$0xff]
  %v52 = vld [vmem:[%s2 + $0x18] sm:$0xff]
  %v53 = vld [vmem:[%s3] sm:$0xff]
  %v54 = vld [vmem:[%s3 + $0x8] sm:$0xff]
  %v55 = vld [vmem:[%s3 + $0x10] sm:$0xff]
  %v56 = vld [vmem:[%s3 + $0x18] sm:$0xff]
  %58 = vset.pattern.permute.xlu0 0
  %59 = vperm.xlu0 %58, %v53
  %v60 = vpop.permute.xlu0 %59
  %63 = vset.pattern.permute.xlu0 0
  %64 = vperm.xlu0 %63, %v54
  %v65 = vpop.permute.xlu0 %64
  %68 = vset.pattern.permute.xlu0 0
  %69 = vperm.xlu0 %68, %v55
  %v70 = vpop.permute.xlu0 %69
  %73 = vset.pattern.permute.xlu0 0
  %74 = vperm.xlu0 %73, %v56
  %v75 = vpop.permute.xlu0 %74
  %vm77 = vcmask 130048
  %v79 = vsel %vm77, %v49, 0
  %v82 = vsel %vm77, %v50, 0
  %v85 = vsel %vm77, %v51, 0
  %v88 = vsel %vm77, %v52, 0
  %90 = vmatpush.msra.mxu0 0.0
  %91 = vmatpush.msra.mxu0 0.0
  %92 = vmatpush.msra.mxu0 0.0
  %93 = vmatpush.msra.mxu0 0.0
  %94 = vmatpush.msra.mxu0 0.0
  %95 = vmatpush.msra.mxu0 0.0
  %96 = vmatpush.msra.mxu0 0.0
  %97 = vmatpush.msra.mxu0 0.0
  %98 = vmatpush.msra.mxu0 0.0
  %99 = vmatpush.msra.mxu0 0.0
  %100 = vmatpush.msra.mxu0 0.0
  %101 = vmatpush.msra.mxu0 0.0
  %102 = vmatpush.msra.mxu0 0.0
  %103 = vmatpush.msra.mxu0 0.0
  %104 = vmatpush.msra.mxu0 %v48
  %105 = vmatpush.msra.mxu0 %v47
  %106 = vmatmul.f32.gmra.mxu0 %v79
  %v107 = vpop.f32.mrf.mxu0
  %v108 = vadd.f32 %v60, %v107
  %109 = vmatmul.f32.gmra.mxu0 %v82
  %v110 = vpop.f32.mrf.mxu0
  %v111 = vadd.f32 %v65, %v110
  %112 = vmatmul.f32.gmra.mxu0 %v85
  %v113 = vpop.f32.mrf.mxu0
  %v114 = vadd.f32 %v70, %v113
  %115 = vmatmul.f32.gmra.mxu0 %v88
  %v116 = vpop.f32.mrf.mxu0
  %v117 = vadd.f32 %v75, %v116
  %118 = vdwg.mxu0
  %v119 = vtanh.pop %v108
  %v120 = vtanh.pop %v111
  %v121 = vtanh.pop %v114
  %v122 = vtanh.pop %v117
  %v123 = vld [vmem:[%s4] sm:$0xff]
  %v124 = vld [vmem:[%s4 + $0x8] sm:$0xff]
  %v125 = vld [vmem:[%s4 + $0x10] sm:$0xff]
  %v126 = vld [vmem:[%s4 + $0x18] sm:$0xff]
  %v127 = vld [vmem:[%s5] sm:$0xff]
  %v128 = vld [vmem:[%s5 + $0x8] sm:$0xff]
  %v129 = vld [vmem:[%s5 + $0x10] sm:$0xff]
  %v130 = vld [vmem:[%s5 + $0x18] sm:$0xff]
  %132 = vset.pattern.permute.xlu0 0
  %133 = vperm.xlu0 %132, %v127
  %v134 = vpop.permute.xlu0 %133
  %137 = vset.pattern.permute.xlu0 0
  %138 = vperm.xlu0 %137, %v128
  %v139 = vpop.permute.xlu0 %138
  %142 = vset.pattern.permute.xlu0 0
  %143 = vperm.xlu0 %142, %v129
  %v144 = vpop.permute.xlu0 %143
  %147 = vset.pattern.permute.xlu0 0
  %148 = vperm.xlu0 %147, %v130
  %v149 = vpop.permute.xlu0 %148
  %vm151 = vcmask 261120
  %v153 = vsel %vm151, %v123, 0
  %v156 = vsel %vm151, %v124, 0
  %v159 = vsel %vm151, %v125, 0
  %v162 = vsel %vm151, %v126, 0
  %164 = vmatpush.msra.mxu0 0.0
  %165 = vmatpush.msra.mxu0 0.0
  %166 = vmatpush.msra.mxu0 0.0
  %167 = vmatpush.msra.mxu0 0.0
  %168 = vmatpush.msra.mxu0 0.0
  %169 = vmatpush.msra.mxu0 0.0
  %170 = vmatpush.msra.mxu0 0.0
  %171 = vmatpush.msra.mxu0 0.0
  %172 = vmatpush.msra.mxu0 0.0
  %173 = vmatpush.msra.mxu0 0.0
  %174 = vmatpush.msra.mxu0 0.0
  %175 = vmatpush.msra.mxu0 0.0
  %176 = vmatpush.msra.mxu0 %v122
  %177 = vmatpush.msra.mxu0 %v121
  %178 = vmatpush.msra.mxu0 %v120
  %179 = vmatpush.msra.mxu0 %v119
  %180 = vmatmul.f32.gmra.mxu0 %v153
  %v181 = vpop.f32.mrf.mxu0
  %v182 = vadd.f32 %v134, %v181
  %183 = vmatmul.f32.gmra.mxu0 %v156
  %v184 = vpop.f32.mrf.mxu0
  %v185 = vadd.f32 %v139, %v184
  %186 = vmatmul.f32.gmra.mxu0 %v159
  %v187 = vpop.f32.mrf.mxu0
  %v188 = vadd.f32 %v144, %v187
  %189 = vmatmul.f32.gmra.mxu0 %v162
  %v190 = vpop.f32.mrf.mxu0
  %v191 = vadd.f32 %v149, %v190
  %192 = vdwg.mxu0
  %v193 = vtanh.pop %v182
  %v194 = vtanh.pop %v185
  %v195 = vtanh.pop %v188
  %v196 = vtanh.pop %v191
  %v197 = vld [vmem:[%s6] sm:$0xff]
  %v198 = vld [vmem:[%s6 + $0x8] sm:$0xff]
  %v199 = vld [vmem:[%s6 + $0x10] sm:$0xff]
  %v200 = vld [vmem:[%s6 + $0x18] sm:$0xff]
  %v201 = vld [vmem:[%s7] sm:$0xff]
  %v202 = vld [vmem:[%s7 + $0x8] sm:$0xff]
  %v203 = vld [vmem:[%s7 + $0x10] sm:$0xff]
  %v204 = vld [vmem:[%s7 + $0x18] sm:$0xff]
  %206 = vset.pattern.permute.xlu0 0
  %207 = vperm.xlu0 %206, %v201
  %v208 = vpop.permute.xlu0 %207
  %211 = vset.pattern.permute.xlu0 0
  %212 = vperm.xlu0 %211, %v202
  %v213 = vpop.permute.xlu0 %212
  %216 = vset.pattern.permute.xlu0 0
  %217 = vperm.xlu0 %216, %v203
  %v218 = vpop.permute.xlu0 %217
  %221 = vset.pattern.permute.xlu0 0
  %222 = vperm.xlu0 %221, %v204
  %v223 = vpop.permute.xlu0 %222
  %v226 = vsel %vm151, %v197, 0
  %v229 = vsel %vm151, %v198, 0
  %v232 = vsel %vm151, %v199, 0
  %v235 = vsel %vm151, %v200, 0
  %237 = vmatpush.msra.mxu0 0.0
  %238 = vmatpush.msra.mxu0 0.0
  %239 = vmatpush.msra.mxu0 0.0
  %240 = vmatpush.msra.mxu0 0.0
  %241 = vmatpush.msra.mxu0 0.0
  %242 = vmatpush.msra.mxu0 0.0
  %243 = vmatpush.msra.mxu0 0.0
  %244 = vmatpush.msra.mxu0 0.0
  %245 = vmatpush.msra.mxu0 0.0
  %246 = vmatpush.msra.mxu0 0.0
  %247 = vmatpush.msra.mxu0 0.0
  %248 = vmatpush.msra.mxu0 0.0
  %249 = vmatpush.msra.mxu0 %v196
  %250 = vmatpush.msra.mxu0 %v195
  %251 = vmatpush.msra.mxu0 %v194
  %252 = vmatpush.msra.mxu0 %v193
  %253 = vmatmul.f32.gmra.mxu0 %v226
  %v254 = vpop.f32.mrf.mxu0
  %v255 = vadd.f32 %v208, %v254
  %256 = vmatmul.f32.gmra.mxu0 %v229
  %v257 = vpop.f32.mrf.mxu0
  %v258 = vadd.f32 %v213, %v257
  %259 = vmatmul.f32.gmra.mxu0 %v232
  %v260 = vpop.f32.mrf.mxu0
  %v261 = vadd.f32 %v218, %v260
  %262 = vmatmul.f32.gmra.mxu0 %v235
  %v263 = vpop.f32.mrf.mxu0
  %v264 = vadd.f32 %v223, %v263
  %265 = vdwg.mxu0
  %v266 = vmul.f32 %v255, 1.442695
  %v267 = vpow.pop %v266
  %v268 = vmul.f32 %v258, 1.442695
  %v269 = vpow.pop %v268
  %v270 = vmul.f32 %v31, %v267
  %v271 = vmul.f32 %v32, %v269
  %v272 = vadd.f32 %v261, %v270
  %v273 = vadd.f32 %v264, %v271
  %v274 = vsel %vm45, %v31, %v272
  %v275 = vsel %vm46, %v32, %v273
  %276 = vst [vmem:[%s8] sm:$0xff] %v274
  %277 = vst [vmem:[%s8 + $0x8] sm:$0xff] %v275
  %v278 = vsel %vm45, 0.0, %v255
  %v279 = vsel %vm46, 0.0, %v258
  %v280 = vadd.f32 %v278, %v279
  %v281 = vrot.slane %v280, 4
  %v282 = vadd.f32 %v280, %v281
  %v283 = vrot.slane %v282, 2
  %v284 = vadd.f32 %v282, %v283
  %v285 = vrot.slane %v284, 1
  %v286 = vadd.f32 %v284, %v285
  %287 = vst [vmem:[%s9] sm:$0x1] %v286
  // Predicated region
  $region34: #{affine_coupling_flow_forward_lane_dense.1} parent=0 // pred_check
    _
  $region35: #{affine_coupling_flow_forward_lane_dense.1} parent=0 // pred_check_branch
    %289 = sbr.rel (0) target = $region37
  $region36: #{affine_coupling_flow_forward_lane_dense.1} parent=0 // pred_region
    _
  $region37: #{affine_coupling_flow_forward_lane_dense.1} parent=0 // pred_fallthru
    _
  // Predicated region
  $region38: #{affine_coupling_flow_forward_lane_dense.1} parent=0 // pred_check
    _
  $region39: #{affine_coupling_flow_forward_lane_dense.1} parent=0 // pred_check_branch
    %291 = sbr.rel (0) target = $region41
  $region40: #{affine_coupling_flow_forward_lane_dense.1} parent=0 // pred_region
    _
  $region41: #{affine_coupling_flow_forward_lane_dense.1} parent=0 // pred_fallthru
    _
  // Predicated region
  $region42: #{affine_coupling_flow_forward_lane_dense.1} parent=0 // pred_check
    _
  $region43: #{affine_coupling_flow_forward_lane_dense.1} parent=0 // pred_check_branch
    %293 = sbr.rel (0) target = $region45
  $region44: #{affine_coupling_flow_forward_lane_dense.1} parent=0 // pred_region
    _
  $region45: #{affine_coupling_flow_forward_lane_dense.1} parent=0 // pred_fallthru
    _
  // Predicated region
  $region46: #{affine_coupling_flow_forward_lane_dense.1} parent=0 // pred_check
    _
  $region47: #{affine_coupling_flow_forward_lane_dense.1} parent=0 // pred_check_branch
    %295 = sbr.rel (0) target = $region49
  $region48: #{affine_coupling_flow_forward_lane_dense.1} parent=0 // pred_region
    _
  $region49: #{affine_coupling_flow_forward_lane_dense.1} parent=0 // pred_fallthru
    _

</llo_original>
